<compile_context>
chip_gen: v5e
topology: v5e:2x2
jax: 0.10.0
libtpu: 0.0.40
codegen_flags: <defaults>
</compile_context>

<pallas_src>
import jax
import jax.numpy as jnp
from jax.experimental import pallas as pl
from jax.experimental.pallas import tpu as pltpu

LANE = 128  # TPU lane width: keep every last dim a multiple of this


def _round_up(n, m):
    return ((n + m - 1) // m) * m


def _cdiv(a, b):
    return -(-a // b)


def _softplus(x):
    # numerically stable softplus (VPU + EUP ops)
    return jnp.maximum(x, 0.0) + jnp.log1p(jnp.exp(-jnp.abs(x)))


def vae_forward_kernel(
    x_ref, eps_ref,
    w1_ref, b1_ref, wls_ref, bls_ref,
    wd1_ref, bd1_ref, wd2_ref, bd2_ref,
    lat_ref, recon_ref,
    h_ref,
):
    k = pl.program_id(1)
    kd = pl.num_programs(1) // 2     # number of D chunks (length of each phase)
    lp = eps_ref.shape[-1]           # padded latent width (multiple of 128)
    cdt = w1_ref.dtype               # MXU compute dtype (bfloat16)

    # ---- phase 1 (k in [0, kd)): stream x / w1 chunks, accumulate encoder hidden ----
    @pl.when(k == 0)
    def _():
        h_ref[...] = jnp.zeros_like(h_ref)

    @pl.when(k < kd)
    def _():
        h_ref[...] += jnp.dot(x_ref[...], w1_ref[...],
                              preferred_element_type=jnp.float32)

    # ---- end of phase 1: finish encoder, rsample, decoder first layer ----
    @pl.when(k == kd - 1)
    def _():
        h = jnp.maximum(h_ref[...] + b1_ref[...], 0.0)
        # fused loc|scale heads: one (Hp, 2*Lp) matmul
        head = jnp.dot(h.astype(cdt), wls_ref[...],
                       preferred_element_type=jnp.float32) + bls_ref[...]
        loc = head[:, :lp]
        scale = _softplus(head[:, lp:]) + 1e-6          # strictly positive stdev
        z = loc + scale * eps_ref[...]                  # reparameterized rsample
        hd = jnp.dot(z.astype(cdt), wd1_ref[...],
                     preferred_element_type=jnp.float32) + bd1_ref[...]
        hd = jnp.maximum(hd, 0.0)
        # lane-dense packed latent output: [loc | scale | z]
        lat_ref[:, :lp] = loc
        lat_ref[:, lp:2 * lp] = scale
        lat_ref[:, 2 * lp:] = z
        # reuse the f32 scratch as the decoder hidden for phase 2
        h_ref[...] = hd

    # ---- phase 2 (k in [kd, 2*kd)): stream wd2 chunks, write recon chunk-by-chunk ----
    @pl.when(k >= kd)
    def _():
        logits = jnp.dot(h_ref[...].astype(cdt), wd2_ref[...],
                         preferred_element_type=jnp.float32) + bd2_ref[...]
        recon = 0.5 * jnp.tanh(0.5 * logits) + 0.5      # sigmoid with a single EUP op
        recon_ref[...] = recon.astype(recon_ref.dtype)  # bf16 writeback


def vae_forward(snp_data, eps, params, *, batch_tile=None, d_tile=None,
                compute_dtype=jnp.bfloat16):
    """snp_data: (B, D_in) f32, eps: (B, L) f32 noise, params: dict of 2D weights/biases.

    Returns (loc, scale, z, reconstructions).  loc/scale/z are f32, reconstructions bf16
    (f32 math in-kernel; cast to f32 outside if needed).  All outputs are unpadded.
    """
    B, D_in = snp_data.shape
    L = eps.shape[1]
    hidden = params["w1"].shape[1]

    # ---- hardware-derived budgets ----
    try:
        info = pltpu.get_tpu_info()
        vmem_cap = int(getattr(info, "vmem_capacity_bytes", 64 * 1024 * 1024))
    except Exception:
        vmem_cap = 64 * 1024 * 1024
    vmem_limit = min(int(vmem_cap * 4) // 5, 100 * 1024 * 1024)   # ~100 MiB v5e/v6e, ~51 MiB v7x

    Hp = _round_up(hidden, LANE)
    Lp = _round_up(L, LANE)

    # ---- batch tile ----
    if batch_tile is None:
        batch_tile = 256 if vmem_cap >= (100 << 20) else 128
    TB = min(batch_tile, _round_up(B, 8))
    if _cdiv(B, TB) == 1 and B >= 128:
        TB = _round_up(_cdiv(B, 2), 8)       # >= 2 "parallel" steps -> both v7x TCs busy
    Bp = _round_up(B, TB)
    NB = Bp // TB

    # ---- D tile (input-feature / reconstruction axis) ----
    Dp0 = _round_up(D_in, LANE)
    if d_tile is None:
        bpe = 2  # bf16 bytes per element
        fixed = (2 * TB * Lp * 4                      # eps in (double-buffered)
                 + 2 * TB * 3 * Lp * 4                # packed lat out
                 + 2 * (Hp * 4 + Hp * 2 * Lp * bpe + 2 * Lp * 4
                        + Lp * Hp * bpe + Hp * 4)     # constant weight/bias blocks
                 + TB * Hp * 4)                       # f32 scratch accumulator
        # per-D-column cost of double-buffered x, w1, wd2, recon, bd2 blocks
        slope = 2 * (TB * bpe + Hp * bpe + Hp * bpe + TB * bpe + 4)
        budget = (vmem_limit * 3) // 5                # leave headroom for compiler scratch
        d_tile = max(LANE, ((budget - fixed) // max(slope, 1)) // LANE * LANE)
    TD = min(_round_up(d_tile, LANE), Dp0)
    KD = _cdiv(Dp0, TD)
    Dp = KD * TD
    last_in = KD - 1

    def pad2(a, rows, cols, dtype):
        a = jnp.asarray(a, dtype)
        return jnp.pad(a, ((0, rows - a.shape[0]), (0, cols - a.shape[1])))

    # zero-padding keeps the math exact: padded x cols hit zero w1 rows, padded latent
    # cols get loc=0 and eps=0 so z=0, which hits zero rows of wd1 (see header comment).
    x_p = pad2(snp_data, Bp, Dp, compute_dtype)
    eps_p = pad2(eps, Bp, Lp, jnp.float32)

    w1 = pad2(params["w1"], Dp, Hp, compute_dtype)
    b1 = pad2(params["b1"], 1, Hp, jnp.float32)
    wls = jnp.concatenate(                                     # fused loc|scale head
        [pad2(params["wl"], Hp, Lp, compute_dtype),
         pad2(params["ws"], Hp, Lp, compute_dtype)], axis=1)
    bls = jnp.concatenate(
        [pad2(params["bl"], 1, Lp, jnp.float32),
         pad2(params["bs"], 1, Lp, jnp.float32)], axis=1)
    wd1 = pad2(params["wd1"], Lp, Hp, compute_dtype)
    bd1 = pad2(params["bd1"], 1, Hp, jnp.float32)
    wd2 = pad2(params["wd2"], Hp, Dp, compute_dtype)
    bd2 = pad2(params["bd2"], 1, Dp, jnp.float32)

    grid = (NB, 2 * KD)

    # index maps clamp the unused-phase index so blocks are never re-fetched needlessly
    in_specs = [
        pl.BlockSpec((TB, TD), lambda i, k: (i, jnp.minimum(k, last_in))),   # x
        pl.BlockSpec((TB, Lp), lambda i, k: (i, 0)),                         # eps
        pl.BlockSpec((TD, Hp), lambda i, k: (jnp.minimum(k, last_in), 0)),   # w1 (streamed)
        pl.BlockSpec((1, Hp), lambda i, k: (0, 0)),                          # b1
        pl.BlockSpec((Hp, 2 * Lp), lambda i, k: (0, 0)),                     # wls
        pl.BlockSpec((1, 2 * Lp), lambda i, k: (0, 0)),                      # bls
        pl.BlockSpec((Lp, Hp), lambda i, k: (0, 0)),                         # wd1
        pl.BlockSpec((1, Hp), lambda i, k: (0, 0)),                          # bd1
        pl.BlockSpec((Hp, TD), lambda i, k: (0, jnp.maximum(k - KD, 0))),    # wd2 (streamed)
        pl.BlockSpec((1, TD), lambda i, k: (0, jnp.maximum(k - KD, 0))),     # bd2
    ]
    out_specs = (
        pl.BlockSpec((TB, 3 * Lp), lambda i, k: (i, 0)),                     # packed lat
        pl.BlockSpec((TB, TD), lambda i, k: (i, jnp.maximum(k - KD, 0))),    # recon chunks
    )

    lat, recon_p = pl.pallas_call(
        vae_forward_kernel,
        out_shape=(
            jax.ShapeDtypeStruct((Bp, 3 * Lp), jnp.float32),   # packed [loc|scale|z]
            jax.ShapeDtypeStruct((Bp, Dp), jnp.bfloat16),      # reconstructions (bf16)
        ),
        grid=grid,
        in_specs=in_specs,
        out_specs=out_specs,
        scratch_shapes=[pltpu.VMEM((TB, Hp), jnp.float32)],    # encoder acc / decoder hidden
        compiler_params=pltpu.CompilerParams(
            dimension_semantics=("parallel", "arbitrary"),
            vmem_limit_bytes=vmem_limit,
        ),
    )(x_p, eps_p, w1, b1, wls, bls, wd1, bd1, wd2, bd2)

    loc = lat[:B, :L]
    scale = lat[:B, Lp:Lp + L]
    z = lat[:B, 2 * Lp:2 * Lp + L]
    recon = recon_p[:B, :D_in]
    return loc, scale, z, recon


def vae_forward_ref(x, eps, p):
    """Pure-JAX f32 reference of the same forward pass."""
    h = jnp.maximum(x @ p["w1"] + p["b1"], 0.0)
    loc = h @ p["wl"] + p["bl"]
    scale = jax.nn.softplus(h @ p["ws"] + p["bs"]) + 1e-6
    z = loc + scale * eps
    hd = jnp.maximum(z @ p["wd1"] + p["bd1"], 0.0)
    recon = jax.nn.sigmoid(hd @ p["wd2"] + p["bd2"])
    return loc, scale, z, recon


def init_params(key, d_in, hidden, latent):
    ks = jax.random.split(key, 6)

    def lin(k, fan_in, fan_out):
        w = jax.random.normal(k, (fan_in, fan_out), jnp.float32) * (1.0 / jnp.sqrt(fan_in))
        b = jnp.zeros((1, fan_out), jnp.float32)
        return w, b

    w1, b1 = lin(ks[0], d_in, hidden)
    wl, bl = lin(ks[1], hidden, latent)
    ws, bs = lin(ks[2], hidden, latent)
    wd1, bd1 = lin(ks[3], latent, hidden)
    wd2, bd2 = lin(ks[4], hidden, d_in)
    return dict(w1=w1, b1=b1, wl=wl, bl=bl, ws=ws, bs=bs,
                wd1=wd1, bd1=bd1, wd2=wd2, bd2=bd2)


if __name__ == "__main__":
    key = jax.random.PRNGKey(0)
    k_x, k_eps, k_p = jax.random.split(key, 3)

    B, D_IN, HIDDEN, LATENT = 8, 64, 32, 16

    # synthetic SNP-like data in {0, 1}
    snp_data = (jax.random.uniform(k_x, (B, D_IN)) > 0.5).astype(jnp.float32)
    eps = jax.random.normal(k_eps, (B, LATENT), jnp.float32)   # deterministic rsample noise
    params = init_params(k_p, D_IN, HIDDEN, LATENT)

    loc, scale, z, recon = jax.block_until_ready(vae_forward(snp_data, eps, params))
    loc_r, scale_r, z_r, recon_r = vae_forward_ref(snp_data, eps, params)

    assert loc.shape == (B, LATENT) and scale.shape == (B, LATENT)
    assert z.shape == (B, LATENT) and recon.shape == (B, D_IN)
    assert bool(jnp.all(scale > 0.0))
    assert bool(jnp.all(jnp.isfinite(recon)))
    assert bool(jnp.all(recon >= 0.0)) and bool(jnp.all(recon <= 1.0))
    # bf16 weights/activations in the kernel vs. f32 reference -> loose tolerances
    assert bool(jnp.allclose(loc, loc_r, atol=1e-1, rtol=1e-1))
    assert bool(jnp.allclose(scale, scale_r, atol=1e-1, rtol=1e-1))
    assert bool(jnp.allclose(z, z_r, atol=1e-1, rtol=1e-1))
    assert bool(jnp.allclose(recon, recon_r, atol=5e-2, rtol=5e-2))

    print("KERNEL_OK")
</pallas_src>

<mosaic_0001>
module attributes {stable_mosaic.version = 11 : i64} {
  func.func @vae_forward_kernel(%arg0: i32, %arg1: i32, %arg2: memref<8x128xbf16, #tpu.memory_space<vmem>>, %arg3: memref<8x128xf32, #tpu.memory_space<vmem>>, %arg4: memref<128x128xbf16, #tpu.memory_space<vmem>>, %arg5: memref<1x128xf32, #tpu.memory_space<vmem>>, %arg6: memref<128x256xbf16, #tpu.memory_space<vmem>>, %arg7: memref<1x256xf32, #tpu.memory_space<vmem>>, %arg8: memref<128x128xbf16, #tpu.memory_space<vmem>>, %arg9: memref<1x128xf32, #tpu.memory_space<vmem>>, %arg10: memref<128x128xbf16, #tpu.memory_space<vmem>>, %arg11: memref<1x128xf32, #tpu.memory_space<vmem>>, %arg12: memref<8x384xf32, #tpu.memory_space<vmem>>, %arg13: memref<8x128xbf16, #tpu.memory_space<vmem>>, %arg14: memref<8x128xf32, #tpu.memory_space<vmem>>) attributes {dimension_semantics = [#tpu.dimension_semantics<parallel>, #tpu.dimension_semantics<arbitrary>], iteration_bounds = array<i64: 1, 2>, scalar_prefetch = 0 : i64, scratch_operands = 1 : i64, tpu.core_type = #tpu.core_type<tc>, window_params = [{transform_indices = @transform_0, window_bounds = array<i64: 8, 128>}, {transform_indices = @transform_1, window_bounds = array<i64: 8, 128>}, {transform_indices = @transform_2, window_bounds = array<i64: 128, 128>}, {pipeline_mode = #tpu.pipeline_mode<synchronous>, transform_indices = @transform_3, window_bounds = array<i64: 1, 128>}, {pipeline_mode = #tpu.pipeline_mode<synchronous>, transform_indices = @transform_4, window_bounds = array<i64: 128, 256>}, {pipeline_mode = #tpu.pipeline_mode<synchronous>, transform_indices = @transform_5, window_bounds = array<i64: 1, 256>}, {pipeline_mode = #tpu.pipeline_mode<synchronous>, transform_indices = @transform_6, window_bounds = array<i64: 128, 128>}, {pipeline_mode = #tpu.pipeline_mode<synchronous>, transform_indices = @transform_7, window_bounds = array<i64: 1, 128>}, {transform_indices = @transform_8, window_bounds = array<i64: 128, 128>}, {transform_indices = @transform_9, window_bounds = array<i64: 1, 128>}, {transform_indices = @transform_10, window_bounds = array<i64: 8, 384>}, {transform_indices = @transform_11, window_bounds = array<i64: 8, 128>}]} {
    %c0_i32 = arith.constant 0 : i32
    %0 = arith.cmpi eq, %arg1, %c0_i32 : i32
    %1 = arith.extui %0 : i1 to i32
    %c0_i32_0 = arith.constant 0 : i32
    %2 = arith.cmpi ne, %1, %c0_i32_0 : i32
    scf.if %2 {
      %cst = arith.constant 0.000000e+00 : f32
      %12 = vector.broadcast %cst : f32 to vector<8x128xf32>
      %c0 = arith.constant 0 : index
      %c0_6 = arith.constant 0 : index
      %13 = vector.load %arg14[%c0, %c0_6] : memref<8x128xf32, #tpu.memory_space<vmem>>, vector<8x128xf32>
      tpu.vector_store %arg14[%c0, %c0_6], %12 {strides = array<i32>} : memref<8x128xf32, #tpu.memory_space<vmem>>, vector<8x128xf32>,
    } else {
    }
    %c1_i32 = arith.constant 1 : i32
    %3 = arith.cmpi slt, %arg1, %c1_i32 : i32
    %4 = arith.extui %3 : i1 to i32
    %c0_i32_1 = arith.constant 0 : i32
    %5 = arith.cmpi ne, %4, %c0_i32_1 : i32
    scf.if %5 {
      %c0 = arith.constant 0 : index
      %c0_6 = arith.constant 0 : index
      %12 = vector.load %arg14[%c0, %c0_6] : memref<8x128xf32, #tpu.memory_space<vmem>>, vector<8x128xf32>
      %c0_7 = arith.constant 0 : index
      %c0_8 = arith.constant 0 : index
      %13 = vector.load %arg2[%c0_7, %c0_8] : memref<8x128xbf16, #tpu.memory_space<vmem>>, vector<8x128xbf16>
      %c0_9 = arith.constant 0 : index
      %c0_10 = arith.constant 0 : index
      %14 = vector.load %arg4[%c0_9, %c0_10] : memref<128x128xbf16, #tpu.memory_space<vmem>>, vector<128x128xbf16>
      %cst = arith.constant dense<0.000000e+00> : vector<8x128xf32>
      %15 = tpu.matmul %13, %14, %cst {dimension_numbers = #tpu.dot_dimension_numbers<[1], [0], [0], [1], [0, 0, 1, 1], [], []>} : vector<8x128xbf16>, vector<128x128xbf16>, vector<8x128xf32> -> vector<8x128xf32>
      %16 = arith.addf %12, %15 : vector<8x128xf32>
      %c0_11 = arith.constant 0 : index
      %c0_12 = arith.constant 0 : index
      %17 = vector.load %arg14[%c0_11, %c0_12] : memref<8x128xf32, #tpu.memory_space<vmem>>, vector<8x128xf32>
      tpu.vector_store %arg14[%c0_11, %c0_12], %16 {strides = array<i32>} : memref<8x128xf32, #tpu.memory_space<vmem>>, vector<8x128xf32>,
    } else {
    }
    %c0_i32_2 = arith.constant 0 : i32
    %6 = arith.cmpi eq, %arg1, %c0_i32_2 : i32
    %7 = arith.extui %6 : i1 to i32
    %c0_i32_3 = arith.constant 0 : i32
    %8 = arith.cmpi ne, %7, %c0_i32_3 : i32
    scf.if %8 {
      %c0 = arith.constant 0 : index
      %c0_6 = arith.constant 0 : index
      %12 = vector.load %arg14[%c0, %c0_6] : memref<8x128xf32, #tpu.memory_space<vmem>>, vector<8x128xf32>
      %c0_7 = arith.constant 0 : index
      %c0_8 = arith.constant 0 : index
      %13 = vector.load %arg5[%c0_7, %c0_8] : memref<1x128xf32, #tpu.memory_space<vmem>>, vector<1x128xf32>
      %14 = vector.broadcast %13 : vector<1x128xf32> to vector<8x128xf32>
      %15 = arith.addf %12, %14 : vector<8x128xf32>
      %cst = arith.constant 0.000000e+00 : f32
      %16 = vector.broadcast %cst : f32 to vector<8x128xf32>
      %17 = arith.maximumf %15, %16 : vector<8x128xf32>
      %18 = arith.truncf %17 : vector<8x128xf32> to vector<8x128xbf16>
      %c0_9 = arith.constant 0 : index
      %c0_10 = arith.constant 0 : index
      %19 = vector.load %arg6[%c0_9, %c0_10] : memref<128x256xbf16, #tpu.memory_space<vmem>>, vector<128x256xbf16>
      %cst_11 = arith.constant dense<0.000000e+00> : vector<8x256xf32>
      %20 = tpu.matmul %18, %19, %cst_11 {dimension_numbers = #tpu.dot_dimension_numbers<[1], [0], [0], [1], [0, 0, 1, 1], [], []>} : vector<8x128xbf16>, vector<128x256xbf16>, vector<8x256xf32> -> vector<8x256xf32>
      %c0_12 = arith.constant 0 : index
      %c0_13 = arith.constant 0 : index
      %21 = vector.load %arg7[%c0_12, %c0_13] : memref<1x256xf32, #tpu.memory_space<vmem>>, vector<1x256xf32>
      %22 = vector.broadcast %21 : vector<1x256xf32> to vector<8x256xf32>
      %23 = arith.addf %20, %22 : vector<8x256xf32>
      %24 = vector.extract_strided_slice %23 {offsets = [0, 0], sizes = [8, 128], strides = [1, 1]} : vector<8x256xf32> to vector<8x128xf32>
      %25 = vector.extract_strided_slice %23 {offsets = [0, 128], sizes = [8, 128], strides = [1, 1]} : vector<8x256xf32> to vector<8x128xf32>
      %cst_14 = arith.constant 0.000000e+00 : f32
      %26 = vector.broadcast %cst_14 : f32 to vector<8x128xf32>
      %27 = arith.maximumf %25, %26 : vector<8x128xf32>
      %28 = math.absf %25 : vector<8x128xf32>
      %cst_15 = arith.constant 0.000000e+00 : f32
      %29 = vector.broadcast %cst_15 : f32 to vector<8x128xf32>
      %30 = arith.subf %29, %28 : vector<8x128xf32>
      %31 = math.exp %30 : vector<8x128xf32>
      %32 = math.log1p %31 : vector<8x128xf32>
      %33 = arith.addf %27, %32 : vector<8x128xf32>
      %cst_16 = arith.constant 9.99999997E-7 : f32
      %34 = vector.broadcast %cst_16 : f32 to vector<8x128xf32>
      %35 = arith.addf %33, %34 : vector<8x128xf32>
      %c0_17 = arith.constant 0 : index
      %c0_18 = arith.constant 0 : index
      %36 = vector.load %arg3[%c0_17, %c0_18] : memref<8x128xf32, #tpu.memory_space<vmem>>, vector<8x128xf32>
      %37 = arith.mulf %35, %36 : vector<8x128xf32>
      %38 = arith.addf %24, %37 : vector<8x128xf32>
      %39 = arith.truncf %38 : vector<8x128xf32> to vector<8x128xbf16>
      %c0_19 = arith.constant 0 : index
      %c0_20 = arith.constant 0 : index
      %40 = vector.load %arg8[%c0_19, %c0_20] : memref<128x128xbf16, #tpu.memory_space<vmem>>, vector<128x128xbf16>
      %cst_21 = arith.constant dense<0.000000e+00> : vector<8x128xf32>
      %41 = tpu.matmul %39, %40, %cst_21 {dimension_numbers = #tpu.dot_dimension_numbers<[1], [0], [0], [1], [0, 0, 1, 1], [], []>} : vector<8x128xbf16>, vector<128x128xbf16>, vector<8x128xf32> -> vector<8x128xf32>
      %c0_22 = arith.constant 0 : index
      %c0_23 = arith.constant 0 : index
      %42 = vector.load %arg9[%c0_22, %c0_23] : memref<1x128xf32, #tpu.memory_space<vmem>>, vector<1x128xf32>
      %43 = vector.broadcast %42 : vector<1x128xf32> to vector<8x128xf32>
      %44 = arith.addf %41, %43 : vector<8x128xf32>
      %cst_24 = arith.constant 0.000000e+00 : f32
      %45 = vector.broadcast %cst_24 : f32 to vector<8x128xf32>
      %46 = arith.maximumf %44, %45 : vector<8x128xf32>
      %c0_25 = arith.constant 0 : index
      %c0_26 = arith.constant 0 : index
      %47 = vector.load %arg12[%c0_25, %c0_26] : memref<8x384xf32, #tpu.memory_space<vmem>>, vector<8x128xf32>
      tpu.vector_store %arg12[%c0_25, %c0_26], %24 {strides = array<i32>} : memref<8x384xf32, #tpu.memory_space<vmem>>, vector<8x128xf32>,
      %c0_27 = arith.constant 0 : index
      %c128 = arith.constant 128 : index
      %48 = vector.load %arg12[%c0_27, %c128] : memref<8x384xf32, #tpu.memory_space<vmem>>, vector<8x128xf32>
      tpu.vector_store %arg12[%c0_27, %c128], %35 {strides = array<i32>} : memref<8x384xf32, #tpu.memory_space<vmem>>, vector<8x128xf32>,
      %c0_28 = arith.constant 0 : index
      %c256 = arith.constant 256 : index
      %49 = vector.load %arg12[%c0_28, %c256] : memref<8x384xf32, #tpu.memory_space<vmem>>, vector<8x128xf32>
      tpu.vector_store %arg12[%c0_28, %c256], %38 {strides = array<i32>} : memref<8x384xf32, #tpu.memory_space<vmem>>, vector<8x128xf32>,
      %c0_29 = arith.constant 0 : index
      %c0_30 = arith.constant 0 : index
      %50 = vector.load %arg14[%c0_29, %c0_30] : memref<8x128xf32, #tpu.memory_space<vmem>>, vector<8x128xf32>
      tpu.vector_store %arg14[%c0_29, %c0_30], %46 {strides = array<i32>} : memref<8x128xf32, #tpu.memory_space<vmem>>, vector<8x128xf32>,
    } else {
    }
    %c1_i32_4 = arith.constant 1 : i32
    %9 = arith.cmpi sge, %arg1, %c1_i32_4 : i32
    %10 = arith.extui %9 : i1 to i32
    %c0_i32_5 = arith.constant 0 : i32
    %11 = arith.cmpi ne, %10, %c0_i32_5 : i32
    scf.if %11 {
      %c0 = arith.constant 0 : index
      %c0_6 = arith.constant 0 : index
      %12 = vector.load %arg14[%c0, %c0_6] : memref<8x128xf32, #tpu.memory_space<vmem>>, vector<8x128xf32>
      %13 = arith.truncf %12 : vector<8x128xf32> to vector<8x128xbf16>
      %c0_7 = arith.constant 0 : index
      %c0_8 = arith.constant 0 : index
      %14 = vector.load %arg10[%c0_7, %c0_8] : memref<128x128xbf16, #tpu.memory_space<vmem>>, vector<128x128xbf16>
      %cst = arith.constant dense<0.000000e+00> : vector<8x128xf32>
      %15 = tpu.matmul %13, %14, %cst {dimension_numbers = #tpu.dot_dimension_numbers<[1], [0], [0], [1], [0, 0, 1, 1], [], []>} : vector<8x128xbf16>, vector<128x128xbf16>, vector<8x128xf32> -> vector<8x128xf32>
      %c0_9 = arith.constant 0 : index
      %c0_10 = arith.constant 0 : index
      %16 = vector.load %arg11[%c0_9, %c0_10] : memref<1x128xf32, #tpu.memory_space<vmem>>, vector<1x128xf32>
      %17 = vector.broadcast %16 : vector<1x128xf32> to vector<8x128xf32>
      %18 = arith.addf %15, %17 : vector<8x128xf32>
      %cst_11 = arith.constant 5.000000e-01 : f32
      %19 = vector.broadcast %cst_11 : f32 to vector<8x128xf32>
      %20 = arith.mulf %19, %18 : vector<8x128xf32>
      %21 = math.tanh %20 : vector<8x128xf32>
      %cst_12 = arith.constant 5.000000e-01 : f32
      %22 = vector.broadcast %cst_12 : f32 to vector<8x128xf32>
      %23 = arith.mulf %22, %21 : vector<8x128xf32>
      %cst_13 = arith.constant 5.000000e-01 : f32
      %24 = vector.broadcast %cst_13 : f32 to vector<8x128xf32>
      %25 = arith.addf %23, %24 : vector<8x128xf32>
      %26 = arith.truncf %25 : vector<8x128xf32> to vector<8x128xbf16>
      %c0_14 = arith.constant 0 : index
      %c0_15 = arith.constant 0 : index
      %27 = vector.load %arg13[%c0_14, %c0_15] : memref<8x128xbf16, #tpu.memory_space<vmem>>, vector<8x128xbf16>
      tpu.vector_store %arg13[%c0_14, %c0_15], %26 {strides = array<i32>} : memref<8x128xbf16, #tpu.memory_space<vmem>>, vector<8x128xbf16>,
    } else {
    }
    return
  }
  func.func @transform_0(%arg0: i32, %arg1: i32) -> (i32, i32) {
    %c0_i32 = arith.constant 0 : i32
    %0 = arith.minsi %arg1, %c0_i32 : i32
    %c0_i32_0 = arith.constant 0 : i32
    return %arg0, %0 : i32, i32
  }
  func.func @transform_1(%arg0: i32, %arg1: i32) -> (i32, i32) {
    %c0_i32 = arith.constant 0 : i32
    %c0_i32_0 = arith.constant 0 : i32
    return %arg0, %c0_i32 : i32, i32
  }
  func.func @transform_2(%arg0: i32, %arg1: i32) -> (i32, i32) {
    %c0_i32 = arith.constant 0 : i32
    %0 = arith.minsi %arg1, %c0_i32 : i32
    %c0_i32_0 = arith.constant 0 : i32
    %c0_i32_1 = arith.constant 0 : i32
    return %0, %c0_i32_0 : i32, i32
  }
  func.func @transform_3(%arg0: i32, %arg1: i32) -> (i32, i32) {
    %c0_i32 = arith.constant 0 : i32
    %c0_i32_0 = arith.constant 0 : i32
    %c0_i32_1 = arith.constant 0 : i32
    return %c0_i32, %c0_i32_0 : i32, i32
  }
  func.func @transform_4(%arg0: i32, %arg1: i32) -> (i32, i32) {
    %c0_i32 = arith.constant 0 : i32
    %c0_i32_0 = arith.constant 0 : i32
    %c0_i32_1 = arith.constant 0 : i32
    return %c0_i32, %c0_i32_0 : i32, i32
  }
  func.func @transform_5(%arg0: i32, %arg1: i32) -> (i32, i32) {
    %c0_i32 = arith.constant 0 : i32
    %c0_i32_0 = arith.constant 0 : i32
    %c0_i32_1 = arith.constant 0 : i32
    return %c0_i32, %c0_i32_0 : i32, i32
  }
  func.func @transform_6(%arg0: i32, %arg1: i32) -> (i32, i32) {
    %c0_i32 = arith.constant 0 : i32
    %c0_i32_0 = arith.constant 0 : i32
    %c0_i32_1 = arith.constant 0 : i32
    return %c0_i32, %c0_i32_0 : i32, i32
  }
  func.func @transform_7(%arg0: i32, %arg1: i32) -> (i32, i32) {
    %c0_i32 = arith.constant 0 : i32
    %c0_i32_0 = arith.constant 0 : i32
    %c0_i32_1 = arith.constant 0 : i32
    return %c0_i32, %c0_i32_0 : i32, i32
  }
  func.func @transform_8(%arg0: i32, %arg1: i32) -> (i32, i32) {
    %c1_i32 = arith.constant 1 : i32
    %0 = arith.subi %arg1, %c1_i32 : i32
    %c0_i32 = arith.constant 0 : i32
    %1 = arith.maxsi %0, %c0_i32 : i32
    %c0_i32_0 = arith.constant 0 : i32
    %c0_i32_1 = arith.constant 0 : i32
    return %c0_i32_0, %1 : i32, i32
  }
  func.func @transform_9(%arg0: i32, %arg1: i32) -> (i32, i32) {
    %c1_i32 = arith.constant 1 : i32
    %0 = arith.subi %arg1, %c1_i32 : i32
    %c0_i32 = arith.constant 0 : i32
    %1 = arith.maxsi %0, %c0_i32 : i32
    %c0_i32_0 = arith.constant 0 : i32
    %c0_i32_1 = arith.constant 0 : i32
    return %c0_i32_0, %1 : i32, i32
  }
  func.func @transform_10(%arg0: i32, %arg1: i32) -> (i32, i32) {
    %c0_i32 = arith.constant 0 : i32
    %c0_i32_0 = arith.constant 0 : i32
    return %arg0, %c0_i32 : i32, i32
  }
  func.func @transform_11(%arg0: i32, %arg1: i32) -> (i32, i32) {
    %c1_i32 = arith.constant 1 : i32
    %0 = arith.subi %arg1, %c1_i32 : i32
    %c0_i32 = arith.constant 0 : i32
    %1 = arith.maxsi %0, %c0_i32 : i32
    %c0_i32_0 = arith.constant 0 : i32
    return %arg0, %1 : i32, i32
  }
}

</mosaic_0001>

<llo_original>
// kernel: tpu_custom_call.1
$region0: #{tpu_custom_call.1}
  #allocation0 [shape = 'u32[]', space=smem, size = 0x4, offset = 0x4, fixed_abs, tag = 'smem constant byte address 0x4 - core index']
  #allocation1 [shape = 'u32[72,128]{1,0:T(1,128)}', space=vmem, size = 0x9000, scoped, tag = 'internal scratch']
  #allocation2 [shape = 'f32[8,128]{1,0:T(8,128)}', space=vmem, size = 0x1000, scoped, tag = 'scratch operand']
  %s0 = inlined_call_operand.hbm [shape: bf16[8,128], index: 0, kind: input, shape index: {}]
  %s1 = inlined_call_operand.hbm [shape: f32[8,128], index: 1, kind: input, shape index: {}]
  %s2 = inlined_call_operand.hbm [shape: bf16[128,128], index: 2, kind: input, shape index: {}]
  %s3 = inlined_call_operand.vmem [shape: f32[1,128], index: 3, kind: input, shape index: {}]
  %s4 = inlined_call_operand.hbm [shape: bf16[128,256], index: 4, kind: input, shape index: {}]
  %s5 = inlined_call_operand.vmem [shape: f32[1,256], index: 5, kind: input, shape index: {}]
  %s6 = inlined_call_operand.hbm [shape: bf16[128,128], index: 6, kind: input, shape index: {}]
  %s7 = inlined_call_operand.vmem [shape: f32[1,128], index: 7, kind: input, shape index: {}]
  %s8 = inlined_call_operand.hbm [shape: bf16[128,128], index: 8, kind: input, shape index: {}]
  %s9 = inlined_call_operand.vmem [shape: f32[1,128], index: 9, kind: input, shape index: {}]
  %s10 = inlined_call_operand.hbm [shape: f32[8,384], index: 10, kind: output, shape index: {0}]
  %s11 = inlined_call_operand.hbm [shape: bf16[8,128], index: 11, kind: output, shape index: {1}]
  %12 = xla_tuple %s10, %s11
  %s13 = sld [smem:[#allocation0]]
  $region121: #{tpu_custom_call.1} parent=0
    _
  %s15 = ssub.s32 1, %s13
  %s16 = scalar_select 0, %s15, %s13
  $region1: #{tpu_custom_call.1} parent=0
    #allocation3 [shape = 'u8[4096]{0}', space=vmem, size = 0x1000, scoped, tag = 'input window, operand 0']
    #allocation4 [shape = 's32[2]{0}', space=sflag, size = 0x8, scoped, tag = 'scoped memory for tpu_custom_call.1']
    #allocation5 [shape = 's32[2]{0}', space=sflag, size = 0x8, scoped, tag = 'scoped memory for tpu_custom_call.1']
    #allocation6 [shape = 'u8[4096]{0}', space=vmem, size = 0x1000, scoped, tag = 'input window, operand 1, single buffered']
    #allocation7 [shape = 's32[1]{0}', space=sflag, size = 0x4, scoped, tag = 'scoped memory for tpu_custom_call.1']
    #allocation8 [shape = 'u8[65536]{0}', space=vmem, size = 0x10000, scoped, tag = 'input window, operand 2']
    #allocation9 [shape = 'u8[65536]{0}', space=vmem, size = 0x10000, scoped, tag = 'input window, operand 4, single buffered']
    #allocation10 [shape = 'u8[32768]{0}', space=vmem, size = 0x8000, scoped, tag = 'input window, operand 6, single buffered']
    #allocation11 [shape = 's32[1]{0}', space=sflag, size = 0x4, scoped, tag = 'scoped memory for tpu_custom_call.1']
    #allocation12 [shape = 'u8[65536]{0}', space=vmem, size = 0x10000, scoped, tag = 'input window, operand 8']
    #allocation13 [shape = 'u8[12288]{0}', space=vmem, size = 0x3000, scoped, tag = 'output window, operand 0, single buffered']
    #allocation14 [shape = 'u8[4096]{0}', space=vmem, size = 0x1000, scoped, tag = 'output window, operand 1']
    #allocation15 [shape = 's32[2]{0}', space=sflag, size = 0x8, scoped, tag = 'scoped memory for tpu_custom_call.1']
    %17 = vsyncpa [#allocation4], 0
    %s18 = scalar_lea.sflag [#allocation4], 1
    %19 = vsyncpa %s18, 0
    %20 = vsyncpa [#allocation7], 0
    %21 = vsyncpa [#allocation11], 0
    %22 = vsyncpa [#allocation5], 0
    %23 = vsyncpa [#allocation15], 0
    %s24 = scalar_lea.sflag [#allocation15], 1
    %25 = vsyncpa %s24, 0
    loop: start=0, step=1, limit=4
    $region2: #{tpu_custom_call.1} parent=1 // loop_pre_header
      _
    $region3: #{tpu_custom_call.1} parent=1 // loop_header
      %s27 = sphi 0, %s31
      %p28 = scmp.ge.s32.totalorder %s27, 4
      %s34 = sphi 0, %s46
      %s35 = sphi 0, %s42
      %s36 = sphi 0, %s34
      %s37 = sphi 0, %s35
      %s38 = sphi 0, %s36
      %s39 = sphi 0, %s37
      %s55 = sphi 0, %s57
      %s58 = sphi 0, %s55
      %s59 = sphi 0, %s58
      %s75 = sphi 0, %s59
      %s81 = sphi 0, %s83
      %s84 = sphi 0, %s81
      %s85 = sphi 0, %s84
      %s101 = sphi 0, %s85
      %s111 = sphi 0, %s113
      %s114 = sphi 0, %s111
      %s115 = sphi 0, %s114
      %s131 = sphi 0, %s115
      %s135 = sphi 0, %s135
      %s137 = sphi 0, %s135
      %s138 = sphi 0, %s137
      %s152 = sphi 0, %s138
      %s156 = sphi 0, %s156
      %s158 = sphi 0, %s156
      %s159 = sphi 0, %s158
      %s173 = sphi 0, %s159
      %s177 = sphi 0, %s177
      %s179 = sphi 0, %s177
      %s180 = sphi 0, %s179
      %s194 = sphi 0, %s180
      %s198 = sphi 0, %s198
      %s200 = sphi 0, %s198
      %s201 = sphi 0, %s200
      %s215 = sphi 0, %s201
      %s219 = sphi 0, %s219
      %s221 = sphi 0, %s219
      %s222 = sphi 0, %s221
      %s236 = sphi 0, %s222
      %s248 = sphi 0, %s250
      %s251 = sphi 0, %s248
      %s252 = sphi 0, %s251
      %s268 = sphi 0, %s252
      %s280 = sphi 0, %s282
      %s283 = sphi 0, %s280
      %s284 = sphi 0, %s283
      %s300 = sphi 0, %s284
      %s306 = sphi 0, %s308
      %s309 = sphi 0, %s306
      %s310 = sphi 0, %s309
      %s326 = sphi 0, %s310
      %s340 = sphi 0, %s342
      %s343 = sphi 0, %s340
      %s344 = sphi 0, %s343
      %s360 = sphi 0, %s344
    $region4: #{tpu_custom_call.1} parent=1 // loop_header_branch
      %30 = sbr.rel (%p28) target = $region8
    $region5: #{tpu_custom_call.1} parent=1 // loop_body
      %s32 = ssub.s32 %s27, 1
      %s33 = ssub.s32 %s27, 2
      %s40 = sadd.s32 1, %s35
      %p41 = scmp.ge.s32.totalorder %s40, 2
      %s42 = scalar_select %p41, 0, %s40
      %s43 = sadd.s32 1, %s34
      %s44 = scalar_select %p41, %s43, %s34
      %p45 = scmp.ge.s32.totalorder %s44, 1
      %s46 = scalar_select %p45, 0, %s44
      %p47 = scmp.lt.s32.totalorder %s35, 0
      %s48 = scalar_select %p47, %s35, 0
      %p49 = scmp.lt.s32.totalorder %s42, 0
      %s50 = scalar_select %p49, %s42, 0
      %s51 = ssub.s32 %s34, %s46
      %s52 = ssub.s32 %s48, %s50
      %s53 = sor.u32 %s51, %s52
      %p54 = scmp.eq.s32.totalorder %s53, 0
      %s56 = sadd.s32 %s55, 1
      %s57 = scalar_select %p54, %s55, %s56
      %p60 = pneg %p54
      %p61 = scmp.eq.s32.totalorder %s27, 1
      %p62 = por %p60, %p61
      %p63 = scmp.ne.s32.totalorder %s55, %s58
      %p64 = scmp.eq.s32.totalorder %s27, 0
      %p65 = por %p63, %p64
      %p66 = scmp.ne.s32.totalorder %s55, %s58
      %p67 = scmp.eq.s32.totalorder %s32, 1
      %p68 = por %p66, %p67
      %p69 = scmp.ne.s32.totalorder %s58, %s59
      %p70 = scmp.eq.s32.totalorder %s32, 0
      %p71 = por %p69, %p70
      %p72 = scmp.ne.s32.totalorder %s58, %s59
      %p73 = scmp.eq.s32.totalorder %s33, 1
      %p74 = por %p72, %p73
      %p76 = scmp.ne.s32.totalorder %s59, %s75
      %p77 = scmp.eq.s32.totalorder %s33, 0
      %p78 = por %p76, %p77
      %s79 = ssub.s32 %s34, %s46
      %p80 = scmp.eq.s32.totalorder %s79, 0
      %s82 = sadd.s32 %s81, 1
      %s83 = scalar_select %p80, %s81, %s82
      %p86 = pneg %p80
      %p87 = scmp.eq.s32.totalorder %s27, 1
      %p88 = por %p86, %p87
      %p89 = scmp.ne.s32.totalorder %s81, %s84
      %p90 = scmp.eq.s32.totalorder %s27, 0
      %p91 = por %p89, %p90
      %p92 = scmp.ne.s32.totalorder %s81, %s84
      %p93 = scmp.eq.s32.totalorder %s32, 1
      %p94 = por %p92, %p93
      %p95 = scmp.ne.s32.totalorder %s84, %s85
      %p96 = scmp.eq.s32.totalorder %s32, 0
      %p97 = por %p95, %p96
      %p98 = scmp.ne.s32.totalorder %s84, %s85
      %p99 = scmp.eq.s32.totalorder %s33, 1
      %p100 = por %p98, %p99
      %p102 = scmp.ne.s32.totalorder %s85, %s101
      %p103 = scmp.eq.s32.totalorder %s33, 0
      %p104 = por %p102, %p103
      %p105 = scmp.lt.s32.totalorder %s35, 0
      %s106 = scalar_select %p105, %s35, 0
      %p107 = scmp.lt.s32.totalorder %s42, 0
      %s108 = scalar_select %p107, %s42, 0
      %s109 = ssub.s32 %s106, %s108
      %p110 = scmp.eq.s32.totalorder %s109, 0
      %s112 = sadd.s32 %s111, 1
      %s113 = scalar_select %p110, %s111, %s112
      %p116 = pneg %p110
      %p117 = scmp.eq.s32.totalorder %s27, 1
      %p118 = por %p116, %p117
      %p119 = scmp.ne.s32.totalorder %s111, %s114
      %p120 = scmp.eq.s32.totalorder %s27, 0
      %p121 = por %p119, %p120
      %p122 = scmp.ne.s32.totalorder %s111, %s114
      %p123 = scmp.eq.s32.totalorder %s32, 1
      %p124 = por %p122, %p123
      %p125 = scmp.ne.s32.totalorder %s114, %s115
      %p126 = scmp.eq.s32.totalorder %s32, 0
      %p127 = por %p125, %p126
      %p128 = scmp.ne.s32.totalorder %s114, %s115
      %p129 = scmp.eq.s32.totalorder %s33, 1
      %p130 = por %p128, %p129
      %p132 = scmp.ne.s32.totalorder %s115, %s131
      %p133 = scmp.eq.s32.totalorder %s33, 0
      %p134 = por %p132, %p133
      %s136 = sadd.s32 %s135, 1
      %p139 = scmp.eq.s32.totalorder %s27, 1
      %p140 = scmp.ne.s32.totalorder %s135, %s137
      %p141 = scmp.eq.s32.totalorder %s27, 0
      %p142 = por %p140, %p141
      %p143 = scmp.ne.s32.totalorder %s135, %s137
      %p144 = scmp.eq.s32.totalorder %s32, 1
      %p145 = por %p143, %p144
      %p146 = scmp.ne.s32.totalorder %s137, %s138
      %p147 = scmp.eq.s32.totalorder %s32, 0
      %p148 = por %p146, %p147
      %p149 = scmp.ne.s32.totalorder %s137, %s138
      %p150 = scmp.eq.s32.totalorder %s33, 1
      %p151 = por %p149, %p150
      %p153 = scmp.ne.s32.totalorder %s138, %s152
      %p154 = scmp.eq.s32.totalorder %s33, 0
      %p155 = por %p153, %p154
      %s157 = sadd.s32 %s156, 1
      %p160 = scmp.eq.s32.totalorder %s27, 1
      %p161 = scmp.ne.s32.totalorder %s156, %s158
      %p162 = scmp.eq.s32.totalorder %s27, 0
      %p163 = por %p161, %p162
      %p164 = scmp.ne.s32.totalorder %s156, %s158
      %p165 = scmp.eq.s32.totalorder %s32, 1
      %p166 = por %p164, %p165
      %p167 = scmp.ne.s32.totalorder %s158, %s159
      %p168 = scmp.eq.s32.totalorder %s32, 0
      %p169 = por %p167, %p168
      %p170 = scmp.ne.s32.totalorder %s158, %s159
      %p171 = scmp.eq.s32.totalorder %s33, 1
      %p172 = por %p170, %p171
      %p174 = scmp.ne.s32.totalorder %s159, %s173
      %p175 = scmp.eq.s32.totalorder %s33, 0
      %p176 = por %p174, %p175
      %s178 = sadd.s32 %s177, 1
      %p181 = scmp.eq.s32.totalorder %s27, 1
      %p182 = scmp.ne.s32.totalorder %s177, %s179
      %p183 = scmp.eq.s32.totalorder %s27, 0
      %p184 = por %p182, %p183
      %p185 = scmp.ne.s32.totalorder %s177, %s179
      %p186 = scmp.eq.s32.totalorder %s32, 1
      %p187 = por %p185, %p186
      %p188 = scmp.ne.s32.totalorder %s179, %s180
      %p189 = scmp.eq.s32.totalorder %s32, 0
      %p190 = por %p188, %p189
      %p191 = scmp.ne.s32.totalorder %s179, %s180
      %p192 = scmp.eq.s32.totalorder %s33, 1
      %p193 = por %p191, %p192
      %p195 = scmp.ne.s32.totalorder %s180, %s194
      %p196 = scmp.eq.s32.totalorder %s33, 0
      %p197 = por %p195, %p196
      %s199 = sadd.s32 %s198, 1
      %p202 = scmp.eq.s32.totalorder %s27, 1
      %p203 = scmp.ne.s32.totalorder %s198, %s200
      %p204 = scmp.eq.s32.totalorder %s27, 0
      %p205 = por %p203, %p204
      %p206 = scmp.ne.s32.totalorder %s198, %s200
      %p207 = scmp.eq.s32.totalorder %s32, 1
      %p208 = por %p206, %p207
      %p209 = scmp.ne.s32.totalorder %s200, %s201
      %p210 = scmp.eq.s32.totalorder %s32, 0
      %p211 = por %p209, %p210
      %p212 = scmp.ne.s32.totalorder %s200, %s201
      %p213 = scmp.eq.s32.totalorder %s33, 1
      %p214 = por %p212, %p213
      %p216 = scmp.ne.s32.totalorder %s201, %s215
      %p217 = scmp.eq.s32.totalorder %s33, 0
      %p218 = por %p216, %p217
      %s220 = sadd.s32 %s219, 1
      %p223 = scmp.eq.s32.totalorder %s27, 1
      %p224 = scmp.ne.s32.totalorder %s219, %s221
      %p225 = scmp.eq.s32.totalorder %s27, 0
      %p226 = por %p224, %p225
      %p227 = scmp.ne.s32.totalorder %s219, %s221
      %p228 = scmp.eq.s32.totalorder %s32, 1
      %p229 = por %p227, %p228
      %p230 = scmp.ne.s32.totalorder %s221, %s222
      %p231 = scmp.eq.s32.totalorder %s32, 0
      %p232 = por %p230, %p231
      %p233 = scmp.ne.s32.totalorder %s221, %s222
      %p234 = scmp.eq.s32.totalorder %s33, 1
      %p235 = por %p233, %p234
      %p237 = scmp.ne.s32.totalorder %s222, %s236
      %p238 = scmp.eq.s32.totalorder %s33, 0
      %p239 = por %p237, %p238
      %s240 = ssub.s32 %s35, 1
      %p241 = scmp.gt.s32.totalorder %s240, 0
      %s242 = scalar_select %p241, %s240, 0
      %s243 = ssub.s32 %s42, 1
      %p244 = scmp.gt.s32.totalorder %s243, 0
      %s245 = scalar_select %p244, %s243, 0
      %s246 = ssub.s32 %s242, %s245
      %p247 = scmp.eq.s32.totalorder %s246, 0
      %s249 = sadd.s32 %s248, 1
      %s250 = scalar_select %p247, %s248, %s249
      %p253 = pneg %p247
      %p254 = scmp.eq.s32.totalorder %s27, 1
      %p255 = por %p253, %p254
      %p256 = scmp.ne.s32.totalorder %s248, %s251
      %p257 = scmp.eq.s32.totalorder %s27, 0
      %p258 = por %p256, %p257
      %p259 = scmp.ne.s32.totalorder %s248, %s251
      %p260 = scmp.eq.s32.totalorder %s32, 1
      %p261 = por %p259, %p260
      %p262 = scmp.ne.s32.totalorder %s251, %s252
      %p263 = scmp.eq.s32.totalorder %s32, 0
      %p264 = por %p262, %p263
      %p265 = scmp.ne.s32.totalorder %s251, %s252
      %p266 = scmp.eq.s32.totalorder %s33, 1
      %p267 = por %p265, %p266
      %p269 = scmp.ne.s32.totalorder %s252, %s268
      %p270 = scmp.eq.s32.totalorder %s33, 0
      %p271 = por %p269, %p270
      %s272 = ssub.s32 %s35, 1
      %p273 = scmp.gt.s32.totalorder %s272, 0
      %s274 = scalar_select %p273, %s272, 0
      %s275 = ssub.s32 %s42, 1
      %p276 = scmp.gt.s32.totalorder %s275, 0
      %s277 = scalar_select %p276, %s275, 0
      %s278 = ssub.s32 %s274, %s277
      %p279 = scmp.eq.s32.totalorder %s278, 0
      %s281 = sadd.s32 %s280, 1
      %s282 = scalar_select %p279, %s280, %s281
      %p285 = pneg %p279
      %p286 = scmp.eq.s32.totalorder %s27, 1
      %p287 = por %p285, %p286
      %p288 = scmp.ne.s32.totalorder %s280, %s283
      %p289 = scmp.eq.s32.totalorder %s27, 0
      %p290 = por %p288, %p289
      %p291 = scmp.ne.s32.totalorder %s280, %s283
      %p292 = scmp.eq.s32.totalorder %s32, 1
      %p293 = por %p291, %p292
      %p294 = scmp.ne.s32.totalorder %s283, %s284
      %p295 = scmp.eq.s32.totalorder %s32, 0
      %p296 = por %p294, %p295
      %p297 = scmp.ne.s32.totalorder %s283, %s284
      %p298 = scmp.eq.s32.totalorder %s33, 1
      %p299 = por %p297, %p298
      %p301 = scmp.ne.s32.totalorder %s284, %s300
      %p302 = scmp.eq.s32.totalorder %s33, 0
      %p303 = por %p301, %p302
      %s304 = ssub.s32 %s34, %s46
      %p305 = scmp.eq.s32.totalorder %s304, 0
      %s307 = sadd.s32 %s306, 1
      %s308 = scalar_select %p305, %s306, %s307
      %p311 = pneg %p305
      %p312 = scmp.eq.s32.totalorder %s27, 1
      %p313 = por %p311, %p312
      %p314 = scmp.ne.s32.totalorder %s306, %s309
      %p315 = scmp.eq.s32.totalorder %s27, 0
      %p316 = por %p314, %p315
      %p317 = scmp.ne.s32.totalorder %s306, %s309
      %p318 = scmp.eq.s32.totalorder %s32, 1
      %p319 = por %p317, %p318
      %p320 = scmp.ne.s32.totalorder %s309, %s310
      %p321 = scmp.eq.s32.totalorder %s32, 0
      %p322 = por %p320, %p321
      %p323 = scmp.ne.s32.totalorder %s309, %s310
      %p324 = scmp.eq.s32.totalorder %s33, 1
      %p325 = por %p323, %p324
      %p327 = scmp.ne.s32.totalorder %s310, %s326
      %p328 = scmp.eq.s32.totalorder %s33, 0
      %p329 = por %p327, %p328
      %s330 = ssub.s32 %s35, 1
      %p331 = scmp.gt.s32.totalorder %s330, 0
      %s332 = scalar_select %p331, %s330, 0
      %s333 = ssub.s32 %s42, 1
      %p334 = scmp.gt.s32.totalorder %s333, 0
      %s335 = scalar_select %p334, %s333, 0
      %s336 = ssub.s32 %s34, %s46
      %s337 = ssub.s32 %s332, %s335
      %s338 = sor.u32 %s336, %s337
      %p339 = scmp.eq.s32.totalorder %s338, 0
      %s341 = sadd.s32 %s340, 1
      %s342 = scalar_select %p339, %s340, %s341
      %p345 = pneg %p339
      %p346 = scmp.eq.s32.totalorder %s27, 1
      %p347 = por %p345, %p346
      %p348 = scmp.ne.s32.totalorder %s340, %s343
      %p349 = scmp.eq.s32.totalorder %s27, 0
      %p350 = por %p348, %p349
      %p351 = scmp.ne.s32.totalorder %s340, %s343
      %p352 = scmp.eq.s32.totalorder %s32, 1
      %p353 = por %p351, %p352
      %p354 = scmp.ne.s32.totalorder %s343, %s344
      %p355 = scmp.eq.s32.totalorder %s32, 0
      %p356 = por %p354, %p355
      %p357 = scmp.ne.s32.totalorder %s343, %s344
      %p358 = scmp.eq.s32.totalorder %s33, 1
      %p359 = por %p357, %p358
      %p361 = scmp.ne.s32.totalorder %s344, %s360
      %p362 = scmp.eq.s32.totalorder %s33, 0
      %p363 = por %p361, %p362
      %p364 = scmp.le.s32.totalorder 1, %s27
      %p365 = scmp.lt.s32.totalorder %s27, 3
      %p366 = pnand %p364, %p365
      %p367 = pneg %p366
      // Predicated region
      $region9: #{tpu_custom_call.1} parent=5 // pred_check
        _
      $region10: #{tpu_custom_call.1} parent=5 // pred_check_branch
        %369 = sbr.rel (%p366) target = $region12
      $region11: #{tpu_custom_call.1} parent=5 // pred_region
        %s370 = ssub.s32 %s27, 1
        // Predicated region
        $region13: #{tpu_custom_call.1} parent=11 // pred_check
          %p371 = pneg %p97
        $region14: #{tpu_custom_call.1} parent=11 // pred_check_branch
          %373 = sbr.rel (%p371) target = $region16
        $region15: #{tpu_custom_call.1} parent=11 // pred_region
          %375 = vsyncadd [#allocation7], 0
          %s376 = smul.addr %s36, 8
          %s377 = scalar_lea.hbm %s1, %s376
          %s379 = sshll.u32 %s377, 4
          %s380 = int_to_ptr.hbm [resolvable:$true] %s379
          %s381 = sshll.u32 [#allocation6], 4
          %s382 = int_to_ptr.vmem [resolvable:$true] %s381
          %384 = dma.hbm_to_vmem [thread:$0]  %s380, 128, %s382, [#allocation7]
        $region16: #{tpu_custom_call.1} parent=11 // pred_fallthru
          _
        // Predicated region
        $region17: #{tpu_custom_call.1} parent=11 // pred_check
          %p385 = pneg %p148
        $region18: #{tpu_custom_call.1} parent=11 // pred_check_branch
          %387 = sbr.rel (%p385) target = $region20
        $region19: #{tpu_custom_call.1} parent=11 // pred_region
          _
        $region20: #{tpu_custom_call.1} parent=11 // pred_fallthru
          _
        // Predicated region
        $region21: #{tpu_custom_call.1} parent=11 // pred_check
          %p388 = pneg %p169
        $region22: #{tpu_custom_call.1} parent=11 // pred_check_branch
          %390 = sbr.rel (%p388) target = $region24
        $region23: #{tpu_custom_call.1} parent=11 // pred_region
          %392 = vsyncadd [#allocation7], 0
          %s393 = sshll.u32 %s4, 4
          %s394 = int_to_ptr.hbm [resolvable:$true] %s393
          %s395 = sshll.u32 [#allocation9], 4
          %s396 = int_to_ptr.vmem [resolvable:$true] %s395
          %401 = dma.hbm_to_vmem [thread:$0]  %s394, 2048, %s396, [#allocation7], 128, 128, 8
        $region24: #{tpu_custom_call.1} parent=11 // pred_fallthru
          _
        // Predicated region
        $region25: #{tpu_custom_call.1} parent=11 // pred_check
          %p402 = pneg %p190
        $region26: #{tpu_custom_call.1} parent=11 // pred_check_branch
          %404 = sbr.rel (%p402) target = $region28
        $region27: #{tpu_custom_call.1} parent=11 // pred_region
          _
        $region28: #{tpu_custom_call.1} parent=11 // pred_fallthru
          _
        // Predicated region
        $region29: #{tpu_custom_call.1} parent=11 // pred_check
          %p405 = pneg %p211
        $region30: #{tpu_custom_call.1} parent=11 // pred_check_branch
          %407 = sbr.rel (%p405) target = $region32
        $region31: #{tpu_custom_call.1} parent=11 // pred_region
          %409 = vsyncadd [#allocation11], 0
          %s410 = sshll.u32 %s6, 4
          %s411 = int_to_ptr.hbm [resolvable:$true] %s410
          %s412 = sshll.u32 [#allocation10], 4
          %s413 = int_to_ptr.vmem [resolvable:$true] %s412
          %418 = dma.hbm_to_vmem [thread:$0]  %s411, 1024, %s413, [#allocation11], 64, 64, 4
        $region32: #{tpu_custom_call.1} parent=11 // pred_fallthru
          _
        // Predicated region
        $region33: #{tpu_custom_call.1} parent=11 // pred_check
          %p419 = pneg %p232
        $region34: #{tpu_custom_call.1} parent=11 // pred_check_branch
          %421 = sbr.rel (%p419) target = $region36
        $region35: #{tpu_custom_call.1} parent=11 // pred_region
          _
        $region36: #{tpu_custom_call.1} parent=11 // pred_fallthru
          _
      $region12: #{tpu_custom_call.1} parent=5 // pred_fallthru
        _
      %p422 = scmp.lt.s32.totalorder %s27, 2
      // Predicated region
      $region37: #{tpu_custom_call.1} parent=5 // pred_check
        %p423 = pneg %p422
      $region38: #{tpu_custom_call.1} parent=5 // pred_check_branch
        %425 = sbr.rel (%p423) target = $region40
      $region39: #{tpu_custom_call.1} parent=5 // pred_region
        // Predicated region
        $region41: #{tpu_custom_call.1} parent=39 // pred_check
          %p426 = pneg %p65
        $region42: #{tpu_custom_call.1} parent=39 // pred_check_branch
          %428 = sbr.rel (%p426) target = $region44
        $region43: #{tpu_custom_call.1} parent=39 // pred_region
          %s429 = sand.u32 %s27, 1
          %s430 = scalar_lea.sflag [#allocation4], %s429
          %s431 = sand.u32 %s55, 1
          %s432 = smul.addr %s431, 4
          %s433 = scalar_lea.vmem [#allocation3], %s432
          %p434 = scmp.lt.s32.totalorder %s35, 0
          %s435 = scalar_select %p434, %s35, 0
          %437 = vsyncadd %s430, 0
          %s438 = sadd.s32 %s435, %s34
          %s439 = smul.addr %s438, 4
          %s440 = scalar_lea.hbm %s0, %s439
          %s442 = sshll.u32 %s440, 4
          %s443 = int_to_ptr.hbm [resolvable:$true] %s442
          %s444 = sshll.u32 %s433, 4
          %s445 = int_to_ptr.vmem [resolvable:$true] %s444
          %447 = dma.hbm_to_vmem [thread:$0]  %s443, 64, %s445, %s430
        $region44: #{tpu_custom_call.1} parent=39 // pred_fallthru
          _
        // Predicated region
        $region45: #{tpu_custom_call.1} parent=39 // pred_check
          %p448 = pneg %p121
        $region46: #{tpu_custom_call.1} parent=39 // pred_check_branch
          %450 = sbr.rel (%p448) target = $region48
        $region47: #{tpu_custom_call.1} parent=39 // pred_region
          %s451 = sand.u32 %s27, 1
          %s452 = scalar_lea.sflag [#allocation4], %s451
          %s453 = sand.u32 %s111, 1
          %s454 = smul.addr %s453, 64
          %s455 = scalar_lea.vmem [#allocation8], %s454
          %p456 = scmp.lt.s32.totalorder %s35, 0
          %s457 = scalar_select %p456, %s35, 0
          %s458 = smul.u32 16, %s457
          %460 = vsyncadd %s452, 0
          %s461 = smul.addr %s458, 4
          %s462 = scalar_lea.hbm %s2, %s461
          %s463 = sshll.u32 %s462, 4
          %s464 = int_to_ptr.hbm [resolvable:$true] %s463
          %s465 = sshll.u32 %s455, 4
          %s466 = int_to_ptr.vmem [resolvable:$true] %s465
          %471 = dma.hbm_to_vmem [thread:$0]  %s464, 1024, %s466, %s452, 64, 64, 4
        $region48: #{tpu_custom_call.1} parent=39 // pred_fallthru
          _
        // Predicated region
        $region49: #{tpu_custom_call.1} parent=39 // pred_check
          %p472 = pneg %p258
        $region50: #{tpu_custom_call.1} parent=39 // pred_check_branch
          %474 = sbr.rel (%p472) target = $region52
        $region51: #{tpu_custom_call.1} parent=39 // pred_region
          %s475 = sand.u32 %s27, 1
          %s476 = scalar_lea.sflag [#allocation4], %s475
          %s477 = sand.u32 %s248, 1
          %s478 = smul.addr %s477, 64
          %s479 = scalar_lea.vmem [#allocation12], %s478
          %s480 = ssub.s32 %s35, 1
          %p481 = scmp.gt.s32.totalorder %s480, 0
          %s482 = scalar_select %p481, %s480, 0
          %484 = vsyncadd %s476, 0
          %s485 = smul.addr %s482, 4
          %s486 = scalar_lea.hbm %s8, %s485
          %s487 = sshll.u32 %s486, 4
          %s488 = int_to_ptr.hbm [resolvable:$true] %s487
          %s489 = sshll.u32 %s479, 4
          %s490 = int_to_ptr.vmem [resolvable:$true] %s489
          %495 = dma.hbm_to_vmem [thread:$0]  %s488, 1024, %s490, %s476, 64, 64, 4
        $region52: #{tpu_custom_call.1} parent=39 // pred_fallthru
          _
        // Predicated region
        $region53: #{tpu_custom_call.1} parent=39 // pred_check
          %p496 = pneg %p290
        $region54: #{tpu_custom_call.1} parent=39 // pred_check_branch
          %498 = sbr.rel (%p496) target = $region56
        $region55: #{tpu_custom_call.1} parent=39 // pred_region
          %s499 = ssub.s32 %s35, 1
          %p500 = scmp.gt.s32.totalorder %s499, 0
          %s501 = scalar_select %p500, %s499, 0
          %p502 = scmp.lt.s32.totalorder %s501, 0
          %s503 = scalar_select %p502, %s501, 0
          %s504 = scalar_lea.vmem %s9, %s503
          %s505 = ssub.s32 %s35, 1
          %p506 = scmp.gt.s32.totalorder %s505, 0
          %s507 = scalar_select %p506, %s505, 0
        $region56: #{tpu_custom_call.1} parent=39 // pred_fallthru
          _
      $region40: #{tpu_custom_call.1} parent=5 // pred_fallthru
        _
      %p508 = scmp.le.s32.totalorder 1, %s27
      %p509 = scmp.lt.s32.totalorder %s27, 3
      %p510 = pnand %p508, %p509
      %p511 = pneg %p510
      // Predicated region
      $region57: #{tpu_custom_call.1} parent=5 // pred_check
        _
      $region58: #{tpu_custom_call.1} parent=5 // pred_check_branch
        %513 = sbr.rel (%p510) target = $region60
      $region59: #{tpu_custom_call.1} parent=5 // pred_region
        %s514 = ssub.s32 %s27, 1
        %s515 = sand.u32 %s32, 1
        %s516 = scalar_lea.sflag [#allocation4], %s515
        %s517 = sand.u32 %s58, 1
        %s518 = smul.addr %s517, 4
        %s519 = scalar_lea.vmem [#allocation3], %s518
        // Predicated region
        $region61: #{tpu_custom_call.1} parent=59 // pred_check
          %p520 = pneg %p71
        $region62: #{tpu_custom_call.1} parent=59 // pred_check_branch
          %522 = sbr.rel (%p520) target = $region64
        $region63: #{tpu_custom_call.1} parent=59 // pred_region
          %524 = dma.done %s516, 64
        $region64: #{tpu_custom_call.1} parent=59 // pred_fallthru
          _
        // Predicated region
        $region65: #{tpu_custom_call.1} parent=59 // pred_check
          %p525 = pneg %p97
        $region66: #{tpu_custom_call.1} parent=59 // pred_check_branch
          %527 = sbr.rel (%p525) target = $region68
        $region67: #{tpu_custom_call.1} parent=59 // pred_region
          %529 = dma.done [#allocation7], 128
        $region68: #{tpu_custom_call.1} parent=59 // pred_fallthru
          _
        %s530 = sand.u32 %s32, 1
        %s531 = scalar_lea.sflag [#allocation4], %s530
        %s532 = sand.u32 %s114, 1
        %s533 = smul.addr %s532, 64
        %s534 = scalar_lea.vmem [#allocation8], %s533
        // Predicated region
        $region69: #{tpu_custom_call.1} parent=59 // pred_check
          %p535 = pneg %p127
        $region70: #{tpu_custom_call.1} parent=59 // pred_check_branch
          %537 = sbr.rel (%p535) target = $region72
        $region71: #{tpu_custom_call.1} parent=59 // pred_region
          %539 = dma.done %s531, 1024
        $region72: #{tpu_custom_call.1} parent=59 // pred_fallthru
          _
        // Predicated region
        $region73: #{tpu_custom_call.1} parent=59 // pred_check
          %p540 = pneg %p169
        $region74: #{tpu_custom_call.1} parent=59 // pred_check_branch
          %542 = sbr.rel (%p540) target = $region76
        $region75: #{tpu_custom_call.1} parent=59 // pred_region
          %544 = dma.done [#allocation7], 2048
        $region76: #{tpu_custom_call.1} parent=59 // pred_fallthru
          _
        // Predicated region
        $region77: #{tpu_custom_call.1} parent=59 // pred_check
          %p545 = pneg %p211
        $region78: #{tpu_custom_call.1} parent=59 // pred_check_branch
          %547 = sbr.rel (%p545) target = $region80
        $region79: #{tpu_custom_call.1} parent=59 // pred_region
          %549 = dma.done [#allocation11], 1024
        $region80: #{tpu_custom_call.1} parent=59 // pred_fallthru
          _
        %s550 = sand.u32 %s32, 1
        %s551 = scalar_lea.sflag [#allocation4], %s550
        %s552 = sand.u32 %s251, 1
        %s553 = smul.addr %s552, 64
        %s554 = scalar_lea.vmem [#allocation12], %s553
        // Predicated region
        $region81: #{tpu_custom_call.1} parent=59 // pred_check
          %p555 = pneg %p264
        $region82: #{tpu_custom_call.1} parent=59 // pred_check_branch
          %557 = sbr.rel (%p555) target = $region84
        $region83: #{tpu_custom_call.1} parent=59 // pred_region
          %559 = dma.done %s551, 1024
        $region84: #{tpu_custom_call.1} parent=59 // pred_fallthru
          _
        %s560 = sand.u32 %s32, 1
        %s561 = scalar_lea.sflag [#allocation4], %s560
        %s562 = sand.u32 %s58, 1
        %s563 = smul.addr %s562, 4
        %s564 = scalar_lea.vmem [#allocation3], %s563
        %p565 = pneg %p71
        %p566 = pneg %p68
        %p567 = pneg %p97
        %p568 = pneg %p94
        %s569 = sand.u32 %s32, 1
        %s570 = scalar_lea.sflag [#allocation4], %s569
        %s571 = sand.u32 %s114, 1
        %s572 = smul.addr %s571, 64
        %s573 = scalar_lea.vmem [#allocation8], %s572
        %p574 = pneg %p127
        %p575 = pneg %p124
        %p576 = pneg %p148
        %p577 = pneg %p145
        %p578 = pneg %p169
        %p579 = pneg %p166
        %p580 = pneg %p190
        %p581 = pneg %p187
        %p582 = pneg %p211
        %p583 = pneg %p208
        %p584 = pneg %p232
        %p585 = pneg %p229
        %s586 = sand.u32 %s32, 1
        %s587 = scalar_lea.sflag [#allocation4], %s586
        %s588 = sand.u32 %s251, 1
        %s589 = smul.addr %s588, 64
        %s590 = scalar_lea.vmem [#allocation12], %s589
        %p591 = pneg %p264
        %p592 = pneg %p261
        %s593 = ssub.s32 %s37, 1
        %p594 = scmp.gt.s32.totalorder %s593, 0
        %s595 = scalar_select %p594, %s593, 0
        %p596 = scmp.lt.s32.totalorder %s595, 0
        %s597 = scalar_select %p596, %s595, 0
        %s598 = scalar_lea.vmem %s9, %s597
        %p599 = pneg %p296
        %p600 = pneg %p293
        %p601 = pneg %p322
        %p602 = pneg %p319
        %p603 = pneg %p356
        %p604 = pneg %p353
        %s605 = sand.u32 %s343, 1
        %s606 = scalar_lea.sflag [#allocation15], %s605
        %s607 = sand.u32 %s343, 1
        %s608 = smul.addr %s607, 4
        %s609 = scalar_lea.vmem [#allocation14], %s608
        %p610 = scmp.lt.s32.totalorder %s37, 0
        %s611 = scalar_select %p610, %s37, 0
        %p612 = scmp.lt.s32.totalorder %s37, 0
        %s613 = scalar_select %p612, %s37, 0
        %s614 = smul.u32 16, %s613
        %s615 = ssub.s32 %s37, 1
        %p616 = scmp.gt.s32.totalorder %s615, 0
        %s617 = scalar_select %p616, %s615, 0
        %s618 = ssub.s32 %s37, 1
        %p619 = scmp.gt.s32.totalorder %s618, 0
        %s620 = scalar_select %p619, %s618, 0
        %p621 = scmp.lt.s32.totalorder %s620, 0
        %s622 = scalar_select %p621, %s620, 0
        %s623 = scalar_lea.vmem %s9, %s622
        %s624 = ssub.s32 %s37, 1
        %p625 = scmp.gt.s32.totalorder %s624, 0
        %s626 = scalar_select %p625, %s624, 0
        %s627 = ssub.s32 %s37, 1
        %p628 = scmp.gt.s32.totalorder %s627, 0
        %s629 = scalar_select %p628, %s627, 0
        %p630 = scmp.eq.s32.totalorder %s37, 0
        // Predicated region
        $region85: #{tpu_custom_call.1} parent=59 // pred_check
          %p631 = pneg %p630
        $region86: #{tpu_custom_call.1} parent=59 // pred_check_branch
          %633 = sbr.rel (%p631) target = $region88
        $region87: #{tpu_custom_call.1} parent=59 // pred_region
          %634 = vst [vmem:[#allocation2] sm:$0xff] 0.0
        $region88: #{tpu_custom_call.1} parent=59 // pred_fallthru
          _
        %p635 = scmp.lt.s32.totalorder %s37, 1
        // Predicated region
        $region89: #{tpu_custom_call.1} parent=59 // pred_check
          %p636 = pneg %p635
        $region90: #{tpu_custom_call.1} parent=59 // pred_check_branch
          %638 = sbr.rel (%p636) target = $region92
        $region91: #{tpu_custom_call.1} parent=59 // pred_region
          %v639 = vld [vmem:[#allocation2] sm:$0xff]
          %v640 = vld [vmem:[%s519] sm:$0xf]
          %v641 = vld [vmem:[%s534] sm:$0xf]
          %v642 = vld [vmem:[%s534 + $0x4] sm:$0xf]
          %v643 = vld [vmem:[%s534 + $0x8] sm:$0xf]
          %v644 = vld [vmem:[%s534 + $0xc] sm:$0xf]
          %v645 = vld [vmem:[%s534 + $0x10] sm:$0xf]
          %v646 = vld [vmem:[%s534 + $0x14] sm:$0xf]
          %v647 = vld [vmem:[%s534 + $0x18] sm:$0xf]
          %v648 = vld [vmem:[%s534 + $0x1c] sm:$0xf]
          %v649 = vld [vmem:[%s534 + $0x20] sm:$0xf]
          %v650 = vld [vmem:[%s534 + $0x24] sm:$0xf]
          %v651 = vld [vmem:[%s534 + $0x28] sm:$0xf]
          %v652 = vld [vmem:[%s534 + $0x2c] sm:$0xf]
          %v653 = vld [vmem:[%s534 + $0x30] sm:$0xf]
          %v654 = vld [vmem:[%s534 + $0x34] sm:$0xf]
          %v655 = vld [vmem:[%s534 + $0x38] sm:$0xf]
          %v656 = vld [vmem:[%s534 + $0x3c] sm:$0xf]
          %v673 = vunpack.c.l.b16 %v641
          %v674 = vunpack.c.l.b16 %v642
          %v675 = vunpack.c.l.b16 %v643
          %v676 = vunpack.c.l.b16 %v644
          %v677 = vunpack.c.l.b16 %v645
          %v678 = vunpack.c.l.b16 %v646
          %v679 = vunpack.c.l.b16 %v647
          %v680 = vunpack.c.l.b16 %v648
          %v681 = vunpack.c.l.b16 %v649
          %v682 = vunpack.c.l.b16 %v650
          %v683 = vunpack.c.l.b16 %v651
          %v684 = vunpack.c.l.b16 %v652
          %v685 = vunpack.c.l.b16 %v653
          %v686 = vunpack.c.l.b16 %v654
          %v687 = vunpack.c.l.b16 %v655
          %v688 = vunpack.c.l.b16 %v656
          %v689 = vpack.c.b16 %v674, %v673
          %v690 = vpack.c.b16 %v676, %v675
          %v691 = vpack.c.b16 %v678, %v677
          %v692 = vpack.c.b16 %v680, %v679
          %v693 = vpack.c.b16 %v682, %v681
          %v694 = vpack.c.b16 %v684, %v683
          %v695 = vpack.c.b16 %v686, %v685
          %v696 = vpack.c.b16 %v688, %v687
          %705 = vmatpush.bf16.msra.mxu0 %v696
          %706 = vmatpush.bf16.msra.mxu0 %v695
          %707 = vmatpush.bf16.msra.mxu0 %v694
          %708 = vmatpush.bf16.msra.mxu0 %v693
          %709 = vmatpush.bf16.msra.mxu0 %v692
          %710 = vmatpush.bf16.msra.mxu0 %v691
          %711 = vmatpush.bf16.msra.mxu0 %v690
          %712 = vmatpush.bf16.msra.mxu0 %v689
          %713 = vmatmul.bf16.gmra.mxu0 %v640
          %v714 = vpop.f32.mrf.mxu0
          %v715 = vadd.f32 0.0, %v714
          %v716 = vpop.f32.mrf.mxu0
          %717 = vdwg.mxu0
          %v718 = vadd.f32 %v639, %v715
          %719 = vst [vmem:[#allocation2] sm:$0xff] %v718
        $region92: #{tpu_custom_call.1} parent=59 // pred_fallthru
          _
        // Predicated region
        $region93: #{tpu_custom_call.1} parent=59 // pred_check
          %p720 = pneg %p630
        $region94: #{tpu_custom_call.1} parent=59 // pred_check_branch
          %722 = sbr.rel (%p720) target = $region96
        $region95: #{tpu_custom_call.1} parent=59 // pred_region
          %v723 = vld [vmem:[#allocation2] sm:$0xff]
          %v724 = vld [vmem:[%s3] sm:$0x1]
          %v726 = vperm.slane %v724, 0
          %v728 = vadd.f32 %v723, %v726
          %v729 = vmax.f32 %v728, 0.0
          %v730 = vpack.c.bf16 %v729, %v729
          %v731 = vld [vmem:[#allocation9] sm:$0xff]
          %v732 = vld [vmem:[#allocation9 + $0x8] sm:$0xff]
          %v733 = vld [vmem:[#allocation9 + $0x10] sm:$0xff]
          %v734 = vld [vmem:[#allocation9 + $0x18] sm:$0xff]
          %v735 = vld [vmem:[#allocation9 + $0x20] sm:$0xff]
          %v736 = vld [vmem:[#allocation9 + $0x28] sm:$0xff]
          %v737 = vld [vmem:[#allocation9 + $0x30] sm:$0xff]
          %v738 = vld [vmem:[#allocation9 + $0x38] sm:$0xff]
          %v739 = vld [vmem:[#allocation9 + $0x40] sm:$0xff]
          %v740 = vld [vmem:[#allocation9 + $0x48] sm:$0xff]
          %v741 = vld [vmem:[#allocation9 + $0x50] sm:$0xff]
          %v742 = vld [vmem:[#allocation9 + $0x58] sm:$0xff]
          %v743 = vld [vmem:[#allocation9 + $0x60] sm:$0xff]
          %v744 = vld [vmem:[#allocation9 + $0x68] sm:$0xff]
          %v745 = vld [vmem:[#allocation9 + $0x70] sm:$0xff]
          %v746 = vld [vmem:[#allocation9 + $0x78] sm:$0xff]
          %v747 = vld [vmem:[%s5] sm:$0x3]
          %v749 = vperm.slane %v747, 0
          %v750 = vperm.slane %v747, 1
          %v769 = vunpack.c.l.b16 %v731
          %v770 = vunpack.c.h.b16 %v731
          %v771 = vunpack.c.l.b16 %v732
          %v772 = vunpack.c.h.b16 %v732
          %v773 = vunpack.c.l.b16 %v733
          %v774 = vunpack.c.h.b16 %v733
          %v775 = vunpack.c.l.b16 %v734
          %v776 = vunpack.c.h.b16 %v734
          %v777 = vunpack.c.l.b16 %v735
          %v778 = vunpack.c.h.b16 %v735
          %v779 = vunpack.c.l.b16 %v736
          %v780 = vunpack.c.h.b16 %v736
          %v781 = vunpack.c.l.b16 %v737
          %v782 = vunpack.c.h.b16 %v737
          %v783 = vunpack.c.l.b16 %v738
          %v784 = vunpack.c.h.b16 %v738
          %v785 = vunpack.c.l.b16 %v739
          %v786 = vunpack.c.h.b16 %v739
          %v787 = vunpack.c.l.b16 %v740
          %v788 = vunpack.c.h.b16 %v740
          %v789 = vunpack.c.l.b16 %v741
          %v790 = vunpack.c.h.b16 %v741
          %v791 = vunpack.c.l.b16 %v742
          %v792 = vunpack.c.h.b16 %v742
          %v793 = vunpack.c.l.b16 %v743
          %v794 = vunpack.c.h.b16 %v743
          %v795 = vunpack.c.l.b16 %v744
          %v796 = vunpack.c.h.b16 %v744
          %v797 = vunpack.c.l.b16 %v745
          %v798 = vunpack.c.h.b16 %v745
          %v799 = vunpack.c.l.b16 %v746
          %v800 = vunpack.c.h.b16 %v746
          %v801 = vpack.c.b16 %v771, %v769
          %v802 = vpack.c.b16 %v772, %v770
          %v803 = vpack.c.b16 %v775, %v773
          %v804 = vpack.c.b16 %v776, %v774
          %v805 = vpack.c.b16 %v779, %v777
          %v806 = vpack.c.b16 %v780, %v778
          %v807 = vpack.c.b16 %v783, %v781
          %v808 = vpack.c.b16 %v784, %v782
          %v809 = vpack.c.b16 %v787, %v785
          %v810 = vpack.c.b16 %v788, %v786
          %v811 = vpack.c.b16 %v791, %v789
          %v812 = vpack.c.b16 %v792, %v790
          %v813 = vpack.c.b16 %v795, %v793
          %v814 = vpack.c.b16 %v796, %v794
          %v815 = vpack.c.b16 %v799, %v797
          %v816 = vpack.c.b16 %v800, %v798
          %833 = vmatpush.bf16.msra.mxu0 %v815
          %834 = vmatpush.bf16.msra.mxu0 %v813
          %835 = vmatpush.bf16.msra.mxu0 %v811
          %836 = vmatpush.bf16.msra.mxu0 %v809
          %837 = vmatpush.bf16.msra.mxu0 %v807
          %838 = vmatpush.bf16.msra.mxu0 %v805
          %839 = vmatpush.bf16.msra.mxu0 %v803
          %840 = vmatpush.bf16.msra.mxu0 %v801
          %841 = vmatmul.bf16.gmra.mxu0 %v730
          %v842 = vpop.f32.mrf.mxu0
          %v843 = vadd.f32 %v749, %v842
          %v844 = vpop.f32.mrf.mxu0
          %845 = vdwg.mxu0
          %846 = vmatpush.bf16.msra.mxu0 %v816
          %847 = vmatpush.bf16.msra.mxu0 %v814
          %848 = vmatpush.bf16.msra.mxu0 %v812
          %849 = vmatpush.bf16.msra.mxu0 %v810
          %850 = vmatpush.bf16.msra.mxu0 %v808
          %851 = vmatpush.bf16.msra.mxu0 %v806
          %852 = vmatpush.bf16.msra.mxu0 %v804
          %853 = vmatpush.bf16.msra.mxu0 %v802
          %854 = vmatmul.bf16.gmra.mxu0 %v730
          %v855 = vpop.f32.mrf.mxu0
          %v856 = vadd.f32 %v750, %v855
          %v857 = vpop.f32.mrf.mxu0
          %858 = vdwg.mxu0
          %v859 = vmax.f32 %v856, 0.0
          %v860 = vand.u32 2147483647, %v856
          %v861 = vsub.f32 0.0, %v860
          %v862 = vmul.f32 %v861, 1.442695
          %v863 = vpow.pop %v862
          %v864 = vadd.f32 %v863, 1.0
          %v865 = vlog2.pop %v864
          %v866 = vmul.f32 %v865, 0.6931472
          %v867 = vmul.f32 -0.5, %v863
          %v868 = vadd.f32 %v867, 1.0
          %v869 = vmul.f32 %v868, %v863
          %v870 = vand.u32 2147483647, %v863
          %vm871 = vcmp.lt.f32.partialorder %v870, 0.0004427343
          %v872 = vsel %vm871, %v869, %v866
          %v873 = vadd.f32 %v859, %v872
          %v874 = vadd.f32 %v873, 1e-06
          %v875 = vld [vmem:[#allocation6] sm:$0xff]
          %v876 = vmul.f32 %v874, %v875
          %v877 = vadd.f32 %v843, %v876
          %v878 = vpack.c.bf16 %v877, %v877
          %v879 = vld [vmem:[#allocation10] sm:$0xf]
          %v880 = vld [vmem:[#allocation10 + $0x4] sm:$0xf]
          %v881 = vld [vmem:[#allocation10 + $0x8] sm:$0xf]
          %v882 = vld [vmem:[#allocation10 + $0xc] sm:$0xf]
          %v883 = vld [vmem:[#allocation10 + $0x10] sm:$0xf]
          %v884 = vld [vmem:[#allocation10 + $0x14] sm:$0xf]
          %v885 = vld [vmem:[#allocation10 + $0x18] sm:$0xf]
          %v886 = vld [vmem:[#allocation10 + $0x1c] sm:$0xf]
          %v887 = vld [vmem:[#allocation10 + $0x20] sm:$0xf]
          %v888 = vld [vmem:[#allocation10 + $0x24] sm:$0xf]
          %v889 = vld [vmem:[#allocation10 + $0x28] sm:$0xf]
          %v890 = vld [vmem:[#allocation10 + $0x2c] sm:$0xf]
          %v891 = vld [vmem:[#allocation10 + $0x30] sm:$0xf]
          %v892 = vld [vmem:[#allocation10 + $0x34] sm:$0xf]
          %v893 = vld [vmem:[#allocation10 + $0x38] sm:$0xf]
          %v894 = vld [vmem:[#allocation10 + $0x3c] sm:$0xf]
          %v895 = vld [vmem:[%s7] sm:$0x1]
          %v897 = vperm.slane %v895, 0
          %v915 = vunpack.c.l.b16 %v879
          %v916 = vunpack.c.l.b16 %v880
          %v917 = vunpack.c.l.b16 %v881
          %v918 = vunpack.c.l.b16 %v882
          %v919 = vunpack.c.l.b16 %v883
          %v920 = vunpack.c.l.b16 %v884
          %v921 = vunpack.c.l.b16 %v885
          %v922 = vunpack.c.l.b16 %v886
          %v923 = vunpack.c.l.b16 %v887
          %v924 = vunpack.c.l.b16 %v888
          %v925 = vunpack.c.l.b16 %v889
          %v926 = vunpack.c.l.b16 %v890
          %v927 = vunpack.c.l.b16 %v891
          %v928 = vunpack.c.l.b16 %v892
          %v929 = vunpack.c.l.b16 %v893
          %v930 = vunpack.c.l.b16 %v894
          %v931 = vpack.c.b16 %v916, %v915
          %v932 = vpack.c.b16 %v918, %v917
          %v933 = vpack.c.b16 %v920, %v919
          %v934 = vpack.c.b16 %v922, %v921
          %v935 = vpack.c.b16 %v924, %v923
          %v936 = vpack.c.b16 %v926, %v925
          %v937 = vpack.c.b16 %v928, %v927
          %v938 = vpack.c.b16 %v930, %v929
          %947 = vmatpush.bf16.msra.mxu0 %v938
          %948 = vmatpush.bf16.msra.mxu0 %v937
          %949 = vmatpush.bf16.msra.mxu0 %v936
          %950 = vmatpush.bf16.msra.mxu0 %v935
          %951 = vmatpush.bf16.msra.mxu0 %v934
          %952 = vmatpush.bf16.msra.mxu0 %v933
          %953 = vmatpush.bf16.msra.mxu0 %v932
          %954 = vmatpush.bf16.msra.mxu0 %v931
          %955 = vmatmul.bf16.gmra.mxu0 %v878
          %v956 = vpop.f32.mrf.mxu0
          %v957 = vadd.f32 %v897, %v956
          %v958 = vpop.f32.mrf.mxu0
          %959 = vdwg.mxu0
          %v960 = vmax.f32 %v957, 0.0
          %961 = vst [vmem:[#allocation13] sm:$0xff] %v843
          %962 = vst [vmem:[#allocation13 + $0x8] sm:$0xff] %v874
          %963 = vst [vmem:[#allocation13 + $0x10] sm:$0xff] %v877
          %964 = vst [vmem:[#allocation2] sm:$0xff] %v960
        $region96: #{tpu_custom_call.1} parent=59 // pred_fallthru
          _
        %p965 = scmp.ge.s32.totalorder %s37, 1
        // Predicated region
        $region97: #{tpu_custom_call.1} parent=59 // pred_check
          %p966 = pneg %p965
        $region98: #{tpu_custom_call.1} parent=59 // pred_check_branch
          %968 = sbr.rel (%p966) target = $region100
        $region99: #{tpu_custom_call.1} parent=59 // pred_region
          %v969 = vld [vmem:[#allocation2] sm:$0xff]
          %v970 = vpack.c.bf16 %v969, %v969
          %v971 = vld [vmem:[%s554] sm:$0xf]
          %v972 = vld [vmem:[%s554 + $0x4] sm:$0xf]
          %v973 = vld [vmem:[%s554 + $0x8] sm:$0xf]
          %v974 = vld [vmem:[%s554 + $0xc] sm:$0xf]
          %v975 = vld [vmem:[%s554 + $0x10] sm:$0xf]
          %v976 = vld [vmem:[%s554 + $0x14] sm:$0xf]
          %v977 = vld [vmem:[%s554 + $0x18] sm:$0xf]
          %v978 = vld [vmem:[%s554 + $0x1c] sm:$0xf]
          %v979 = vld [vmem:[%s554 + $0x20] sm:$0xf]
          %v980 = vld [vmem:[%s554 + $0x24] sm:$0xf]
          %v981 = vld [vmem:[%s554 + $0x28] sm:$0xf]
          %v982 = vld [vmem:[%s554 + $0x2c] sm:$0xf]
          %v983 = vld [vmem:[%s554 + $0x30] sm:$0xf]
          %v984 = vld [vmem:[%s554 + $0x34] sm:$0xf]
          %v985 = vld [vmem:[%s554 + $0x38] sm:$0xf]
          %v986 = vld [vmem:[%s554 + $0x3c] sm:$0xf]
          %v987 = vld [vmem:[%s623] sm:$0x1]
          %v989 = vperm.slane %v987, 0
          %v1007 = vunpack.c.l.b16 %v971
          %v1008 = vunpack.c.l.b16 %v972
          %v1009 = vunpack.c.l.b16 %v973
          %v1010 = vunpack.c.l.b16 %v974
          %v1011 = vunpack.c.l.b16 %v975
          %v1012 = vunpack.c.l.b16 %v976
          %v1013 = vunpack.c.l.b16 %v977
          %v1014 = vunpack.c.l.b16 %v978
          %v1015 = vunpack.c.l.b16 %v979
          %v1016 = vunpack.c.l.b16 %v980
          %v1017 = vunpack.c.l.b16 %v981
          %v1018 = vunpack.c.l.b16 %v982
          %v1019 = vunpack.c.l.b16 %v983
          %v1020 = vunpack.c.l.b16 %v984
          %v1021 = vunpack.c.l.b16 %v985
          %v1022 = vunpack.c.l.b16 %v986
          %v1023 = vpack.c.b16 %v1008, %v1007
          %v1024 = vpack.c.b16 %v1010, %v1009
          %v1025 = vpack.c.b16 %v1012, %v1011
          %v1026 = vpack.c.b16 %v1014, %v1013
          %v1027 = vpack.c.b16 %v1016, %v1015
          %v1028 = vpack.c.b16 %v1018, %v1017
          %v1029 = vpack.c.b16 %v1020, %v1019
          %v1030 = vpack.c.b16 %v1022, %v1021
          %1039 = vmatpush.bf16.msra.mxu0 %v1030
          %1040 = vmatpush.bf16.msra.mxu0 %v1029
          %1041 = vmatpush.bf16.msra.mxu0 %v1028
          %1042 = vmatpush.bf16.msra.mxu0 %v1027
          %1043 = vmatpush.bf16.msra.mxu0 %v1026
          %1044 = vmatpush.bf16.msra.mxu0 %v1025
          %1045 = vmatpush.bf16.msra.mxu0 %v1024
          %1046 = vmatpush.bf16.msra.mxu0 %v1023
          %1047 = vmatmul.bf16.gmra.mxu0 %v970
          %v1048 = vpop.f32.mrf.mxu0
          %v1049 = vadd.f32 %v989, %v1048
          %v1050 = vpop.f32.mrf.mxu0
          %1051 = vdwg.mxu0
          %v1052 = vmul.f32 %v1049, 0.5
          %v1053 = vtanh.pop %v1052
          %v1054 = vmul.f32 %v1053, 0.5
          %v1055 = vadd.f32 %v1054, 0.5
          %v1056 = vpack.c.bf16 %v1055, %v1055
          %1057 = vst [vmem:[%s609] sm:$0xf] %v1056
        $region100: #{tpu_custom_call.1} parent=59 // pred_fallthru
          _
        %s1058 = sand.u32 %s343, 1
        %s1059 = scalar_lea.sflag [#allocation15], %s1058
        %s1060 = sand.u32 %s343, 1
        %s1061 = smul.addr %s1060, 4
        %s1062 = scalar_lea.vmem [#allocation14], %s1061
        // Predicated region
        $region101: #{tpu_custom_call.1} parent=59 // pred_check
          %p1063 = pneg %p319
        $region102: #{tpu_custom_call.1} parent=59 // pred_check_branch
          %1065 = sbr.rel (%p1063) target = $region104
        $region103: #{tpu_custom_call.1} parent=59 // pred_region
          %1067 = vsyncadd [#allocation5], 0
          %s1068 = smul.addr %s36, 3
          %s1069 = smul.addr %s1068, 8
          %s1070 = scalar_lea.hbm %s10, %s1069
          %s1072 = sshll.u32 [#allocation13], 4
          %s1073 = int_to_ptr.vmem [resolvable:$true] %s1072
          %s1074 = sshll.u32 %s1070, 4
          %s1075 = int_to_ptr.hbm [resolvable:$true] %s1074
          %1077 = dma.vmem_to_hbm [thread:$0]  %s1073, 384, %s1075, [#allocation5]
        $region104: #{tpu_custom_call.1} parent=59 // pred_fallthru
          _
        // Predicated region
        $region105: #{tpu_custom_call.1} parent=59 // pred_check
          %p1078 = pneg %p353
        $region106: #{tpu_custom_call.1} parent=59 // pred_check_branch
          %1080 = sbr.rel (%p1078) target = $region108
        $region107: #{tpu_custom_call.1} parent=59 // pred_region
          %s1081 = ssub.s32 %s37, 1
          %p1082 = scmp.gt.s32.totalorder %s1081, 0
          %s1083 = scalar_select %p1082, %s1081, 0
          %1085 = vsyncadd %s1059, 0
          %s1086 = sadd.s32 %s1083, %s36
          %s1087 = smul.addr %s1086, 4
          %s1088 = scalar_lea.hbm %s11, %s1087
          %s1090 = sshll.u32 %s1062, 4
          %s1091 = int_to_ptr.vmem [resolvable:$true] %s1090
          %s1092 = sshll.u32 %s1088, 4
          %s1093 = int_to_ptr.hbm [resolvable:$true] %s1092
          %1095 = dma.vmem_to_hbm [thread:$0]  %s1091, 64, %s1093, %s1059
        $region108: #{tpu_custom_call.1} parent=59 // pred_fallthru
          _
        // Predicated region
        $region109: #{tpu_custom_call.1} parent=59 // pred_check
          %p1096 = pneg %p319
        $region110: #{tpu_custom_call.1} parent=59 // pred_check_branch
          %1098 = sbr.rel (%p1096) target = $region112
        $region111: #{tpu_custom_call.1} parent=59 // pred_region
          %1100 = dma.done [#allocation5], 384
        $region112: #{tpu_custom_call.1} parent=59 // pred_fallthru
          _
      $region60: #{tpu_custom_call.1} parent=5 // pred_fallthru
        _
      %p1101 = scmp.le.s32.totalorder 2, %s27
      // Predicated region
      $region113: #{tpu_custom_call.1} parent=5 // pred_check
        %p1102 = pneg %p1101
      $region114: #{tpu_custom_call.1} parent=5 // pred_check_branch
        %1104 = sbr.rel (%p1102) target = $region116
      $region115: #{tpu_custom_call.1} parent=5 // pred_region
        %s1105 = ssub.s32 %s27, 2
        // Predicated region
        $region117: #{tpu_custom_call.1} parent=115 // pred_check
          %p1106 = pneg %p359
        $region118: #{tpu_custom_call.1} parent=115 // pred_check_branch
          %1108 = sbr.rel (%p1106) target = $region120
        $region119: #{tpu_custom_call.1} parent=115 // pred_region
          %s1109 = sand.u32 %s344, 1
          %s1110 = scalar_lea.sflag [#allocation15], %s1109
          %s1111 = sand.u32 %s344, 1
          %s1112 = smul.addr %s1111, 4
          %s1113 = scalar_lea.vmem [#allocation14], %s1112
          %1115 = dma.done %s1110, 64
        $region120: #{tpu_custom_call.1} parent=115 // pred_fallthru
          _
      $region116: #{tpu_custom_call.1} parent=5 // pred_fallthru
        _
    $region6: #{tpu_custom_call.1} parent=1 // loop_footer
      %s31 = sadd.s32 1, %s27
    $region7: #{tpu_custom_call.1} parent=1 // loop_footer_branch
      %26 = sbr.rel target = $region3
    $region8: #{tpu_custom_call.1} parent=1 // loop_exit
      _
    %1116 = vsyncpa [#allocation4], 1
    %s1117 = scalar_lea.sflag [#allocation4], 1
    %1118 = vsyncpa %s1117, 1
    %1119 = vsyncpa [#allocation7], 1
    %1120 = vsyncpa [#allocation11], 1
    %1121 = vsyncpa [#allocation5], 1
    %s1122 = scalar_lea.sflag [#allocation5], 1
    %1123 = vsyncpa %s1122, 1
    %1124 = vsyncpa [#allocation15], 1
    %s1125 = scalar_lea.sflag [#allocation15], 1
    %1126 = vsyncpa %s1125, 1

</llo_original>
